<compile_context>
chip_gen: v6e
topology: v6e:2x2x1
jax: 0.10.0
libtpu: 0.0.40
codegen_flags: <defaults>
</compile_context>

<pallas_src>
import functools

import jax
import jax.numpy as jnp
from jax.experimental import pallas as pl
from jax.experimental.pallas import tpu as pltpu


def _softplus(x):
    # Matches torch.nn.Softplus(beta=1, threshold=20): linear above threshold.
    return jnp.where(x > 20.0, x, jnp.log1p(jnp.exp(jnp.minimum(x, 20.0))))


def _round_up(v, m):
    return ((v + m - 1) // m) * m


def _controller_kernel(x_ref, w1_ref, b1_ref, w2_ref, b2_ref, gates_ref,
                       *, d_memory: int):
    """Fused 2-layer MLP + per-gate activations for one TM-row tile.

    x_ref     : (TM, d_model)          VMEM  f32   (cast to bf16 in-kernel)
    w1_ref    : (d_model, d_model)     VMEM  bf16  (in x out), resident
    b1_ref    : (1, d_model)           VMEM  f32, resident
    w2_ref    : (d_model, OUT_PAD)     VMEM  bf16  (in x out, zero-padded cols)
    b2_ref    : (1, OUT_PAD)           VMEM  f32   (zero-padded cols)
    gates_ref : (TM, OUT_PAD)          VMEM  f32 output (lane-dense, padded)
    """
    # bf16 cast on the VPU, hidden under the tile DMA / MXU work.
    x = x_ref[...].astype(jnp.bfloat16)

    # hidden = ReLUPlus(x @ W1 + b1)  -- bf16 MXU matmul, f32 accumulate.
    h = jnp.dot(x, w1_ref[...], preferred_element_type=jnp.float32)
    h = jnp.maximum(h + b1_ref[...], 0.0)  # ReLUPlus (assumed ReLU), f32

    # gates = h @ W2 + b2
    g = jnp.dot(h.astype(jnp.bfloat16), w2_ref[...],
                preferred_element_type=jnp.float32)
    g = g + b2_ref[...]

    # Column-group activations. Masks built once at (1, OUT_PAD) and broadcast
    # over the rows.
    #   group 2 -> softplus (read_sharpening) : cols [2*dm, 3*dm)
    #   group 4 -> ReLUPlus (decay_logits)    : cols [4*dm, 5*dm)
    col = jax.lax.broadcasted_iota(jnp.int32, (1, g.shape[-1]), 1)
    sp_mask = (col >= 2 * d_memory) & (col < 3 * d_memory)
    relu_mask = (col >= 4 * d_memory) & (col < 5 * d_memory)
    # Full-width softplus + mask: the gate groups are 16 lanes inside one
    # 128-lane register, so a lane-sliced softplus would force relayouts; the
    # kernel is DMA/overhead-bound at these dims, so the extra EUP work is
    # free filler.
    g = jnp.where(sp_mask, _softplus(g), g)
    g = jnp.where(relu_mask, jnp.maximum(g, 0.0), g)

    gates_ref[...] = g.astype(gates_ref.dtype)


def _vmem_capacity_bytes():
    try:
        return int(pltpu.get_tpu_info().vmem_capacity_bytes)
    except Exception:
        return 64 * 1024 * 1024  # conservative: v7x per-TensorCore VMEM


def _choose_tm(m, d_model, out_pad, vmem_budget):
    """Pick the row-tile size TM from the per-chip VMEM budget."""
    # Resident weights (single-buffered, bf16) + biases (f32).
    weight_bytes = d_model * d_model * 2 + d_model * out_pad * 2 \
        + (d_model + out_pad) * 4
    # Per-row bytes: x block (f32, double-buffered) + out block (f32,
    # double-buffered) + in-kernel temporaries (x bf16, h f32, h bf16, g f32).
    per_row = 2 * d_model * 4 + 2 * out_pad * 4 \
        + d_model * (2 + 4 + 2) + out_pad * 4
    tm = (vmem_budget - weight_bytes) // per_row
    tm = max(8, min(1024, tm))
    if m >= 32:
        # Keep the grid >= ~4 steps so dimension_semantics=("parallel",) can
        # shard rows across v7x's two TensorCores.
        tm = min(tm, max(8, _round_up(pl.cdiv(m, 4), 8)))
    tm = min(tm, _round_up(m, 8))
    return _round_up(tm, 8)


def prepare_controller_params(w1, b1, w2, b2, d_memory: int):
    """One-time weight prep (hoisted out of the per-call forward):
    bf16 MXU operands; W2/b2 columns zero-padded to a lane-dense width."""
    d_model = w1.shape[0]
    out_cols = 6 * d_memory
    out_pad = _round_up(out_cols, 128)
    if out_pad != out_cols:
        w2p = jnp.pad(w2, ((0, 0), (0, out_pad - out_cols)))
        b2p = jnp.pad(b2, (0, out_pad - out_cols))
    else:
        w2p, b2p = w2, b2
    params = dict(
        w1=w1.astype(jnp.bfloat16),
        b1=b1.reshape(1, d_model).astype(jnp.float32),
        w2=w2p.astype(jnp.bfloat16),
        b2=b2p.reshape(1, out_pad).astype(jnp.float32),
    )
    return params, out_pad


def controller_forward(x, params, out_pad: int, d_memory: int):
    """x: (..., T, d_model) -> (read_controls, write_controls) dicts of
    tensors of shape (..., T, d_memory)."""
    *lead, d_model = x.shape
    m = 1
    for s in lead:
        m *= s
    x2d = x.reshape(m, d_model).astype(jnp.float32)
    out_cols = 6 * d_memory

    vmem_cap = _vmem_capacity_bytes()
    tm = _choose_tm(m, d_model, out_pad, int(vmem_cap * 0.7))
    grid = (pl.cdiv(m, tm),)

    weight_bytes = (params["w1"].size + params["w2"].size) * 2 \
        + (params["b1"].size + params["b2"].size) * 4
    per_tile = tm * (2 * d_model * 4 + 2 * out_pad * 4
                     + d_model * (2 + 4 + 2) + out_pad * 4)
    vmem_limit = int(min(vmem_cap - (2 << 20),
                         max(32 << 20, 2 * (weight_bytes + per_tile))))

    cost = pl.CostEstimate(
        flops=2 * m * (d_model * d_model + d_model * out_pad),
        transcendentals=2 * m * out_pad,  # exp + log1p over the full tile
        bytes_accessed=x2d.size * 4 + weight_bytes + m * out_pad * 4,
    )

    kernel = functools.partial(_controller_kernel, d_memory=d_memory)

    def run(single_buffer_weights: bool):
        def w_spec(shape):
            if single_buffer_weights:
                # Constant index_map -> fetched once; single-buffer it so the
                # weight VMEM footprint is not doubled (matters on v7x).
                return pl.BlockSpec(shape, lambda i: (0, 0),
                                    pipeline_mode=pl.Buffered(1))
            return pl.BlockSpec(shape, lambda i: (0, 0))

        return pl.pallas_call(
            kernel,
            out_shape=jax.ShapeDtypeStruct((m, out_pad), jnp.float32),
            grid=grid,
            in_specs=[
                pl.BlockSpec((tm, d_model), lambda i: (i, 0)),   # x rows
                w_spec((d_model, d_model)),                      # W1 resident
                w_spec((1, d_model)),                            # b1 resident
                w_spec((d_model, out_pad)),                      # W2 resident
                w_spec((1, out_pad)),                            # b2 resident
            ],
            out_specs=pl.BlockSpec((tm, out_pad), lambda i: (i, 0)),
            compiler_params=pltpu.CompilerParams(
                dimension_semantics=("parallel",),
                vmem_limit_bytes=vmem_limit,
            ),
            cost_estimate=cost,
        )(x2d, params["w1"], params["b1"], params["w2"], params["b2"])

    try:
        gates = run(single_buffer_weights=True)
    except Exception:
        # pipeline_mode=pl.Buffered(1) not supported by this JAX build; fall
        # back to default (double-buffered) resident weights.
        gates = run(single_buffer_weights=False)

    # Strip column padding, then view as (..., 6, d_memory).
    gates = gates[:, :out_cols].reshape(*lead, 6, d_memory)

    read_controls = {
        "read_query": gates[..., 0, :],
        "read_phase_shift": gates[..., 1, :],
        "read_sharpening": gates[..., 2, :],
    }
    write_controls = {
        "update": gates[..., 3, :],
        "decay_logits": gates[..., 4, :],
        "phase_logits": gates[..., 5, :],
    }
    return read_controls, write_controls


def _reference_forward(x, w1, b1, w2, b2, d_memory):
    # Pure f32 reference of the module semantics.
    h = jnp.maximum(x @ w1 + b1, 0.0)
    g = h @ w2 + b2
    g = g.reshape(*x.shape[:-1], 6, d_memory)
    cases = [g[..., k, :] for k in range(6)]
    return (
        cases[0], cases[1], _softplus(cases[2]),
        cases[3], jnp.maximum(cases[4], 0.0), cases[5],
    )


if __name__ == "__main__":
    d_model = 32
    d_memory = 16
    batch = 2
    timestep = 8

    key = jax.random.PRNGKey(0)
    k_x, k_w1, k_b1, k_w2, k_b2 = jax.random.split(key, 5)

    # Input: (batch, timestep, d_model)
    x = jax.random.normal(k_x, (batch, timestep, d_model), dtype=jnp.float32)

    # Deterministic parameter init (PyTorch-Linear-style uniform bounds),
    # stored transposed as (in_features, out_features) for row-major matmul.
    bound1 = 1.0 / (d_model ** 0.5)
    w1 = jax.random.uniform(k_w1, (d_model, d_model), jnp.float32, -bound1, bound1)
    b1 = jax.random.uniform(k_b1, (d_model,), jnp.float32, -bound1, bound1)
    w2 = jax.random.uniform(k_w2, (d_model, 6 * d_memory), jnp.float32, -bound1, bound1)
    b2 = jax.random.uniform(k_b2, (6 * d_memory,), jnp.float32, -bound1, bound1)

    # One-time weight prep, then forward.
    params, out_pad = prepare_controller_params(w1, b1, w2, b2, d_memory)
    read_controls, write_controls = controller_forward(x, params, out_pad, d_memory)
    jax.block_until_ready((read_controls, write_controls))

    # Correctness check against a plain-JAX f32 reference (bf16 MXU operands
    # in the kernel => relaxed tolerance).
    ref = _reference_forward(x, w1, b1, w2, b2, d_memory)
    got = (
        read_controls["read_query"], read_controls["read_phase_shift"],
        read_controls["read_sharpening"], write_controls["update"],
        write_controls["decay_logits"], write_controls["phase_logits"],
    )
    for r, g in zip(ref, got):
        assert r.shape == g.shape == (batch, timestep, d_memory), (r.shape, g.shape)
        assert jnp.allclose(r, g, atol=3e-2, rtol=3e-2), float(jnp.max(jnp.abs(r - g)))

    print("KERNEL_OK")
</pallas_src>

<mosaic_0001>
module attributes {stable_mosaic.version = 11 : i64} {
  func.func @_controller_kernel(%arg0: i32, %arg1: memref<16x32xf32, #tpu.memory_space<vmem>>, %arg2: memref<32x32xbf16, #tpu.memory_space<vmem>>, %arg3: memref<1x32xf32, #tpu.memory_space<vmem>>, %arg4: memref<32x128xbf16, #tpu.memory_space<vmem>>, %arg5: memref<1x128xf32, #tpu.memory_space<vmem>>, %arg6: memref<16x128xf32, #tpu.memory_space<vmem>>) attributes {dimension_semantics = [#tpu.dimension_semantics<parallel>], iteration_bounds = array<i64: 1>, scalar_prefetch = 0 : i64, scratch_operands = 0 : i64, tpu.core_type = #tpu.core_type<tc>, window_params = [{transform_indices = @transform_0, window_bounds = array<i64: 16, 32>}, {pipeline_mode = #tpu.pipeline_mode<synchronous>, transform_indices = @transform_1, window_bounds = array<i64: 32, 32>}, {pipeline_mode = #tpu.pipeline_mode<synchronous>, transform_indices = @transform_2, window_bounds = array<i64: 1, 32>}, {pipeline_mode = #tpu.pipeline_mode<synchronous>, transform_indices = @transform_3, window_bounds = array<i64: 32, 128>}, {pipeline_mode = #tpu.pipeline_mode<synchronous>, transform_indices = @transform_4, window_bounds = array<i64: 1, 128>}, {transform_indices = @transform_5, window_bounds = array<i64: 16, 128>}]} {
    %c0 = arith.constant 0 : index
    %c0_0 = arith.constant 0 : index
    %0 = vector.load %arg1[%c0, %c0_0] : memref<16x32xf32, #tpu.memory_space<vmem>>, vector<16x32xf32>
    %1 = arith.truncf %0 : vector<16x32xf32> to vector<16x32xbf16>
    %c0_1 = arith.constant 0 : index
    %c0_2 = arith.constant 0 : index
    %2 = vector.load %arg2[%c0_1, %c0_2] : memref<32x32xbf16, #tpu.memory_space<vmem>>, vector<32x32xbf16>
    %cst = arith.constant dense<0.000000e+00> : vector<16x32xf32>
    %3 = tpu.matmul %1, %2, %cst {dimension_numbers = #tpu.dot_dimension_numbers<[1], [0], [0], [1], [0, 0, 1, 1], [], []>} : vector<16x32xbf16>, vector<32x32xbf16>, vector<16x32xf32> -> vector<16x32xf32>
    %c0_3 = arith.constant 0 : index
    %c0_4 = arith.constant 0 : index
    %4 = vector.load %arg3[%c0_3, %c0_4] : memref<1x32xf32, #tpu.memory_space<vmem>>, vector<1x32xf32>
    %5 = vector.broadcast %4 : vector<1x32xf32> to vector<16x32xf32>
    %6 = arith.addf %3, %5 : vector<16x32xf32>
    %cst_5 = arith.constant 0.000000e+00 : f32
    %7 = vector.broadcast %cst_5 : f32 to vector<16x32xf32>
    %8 = arith.maximumf %6, %7 : vector<16x32xf32>
    %9 = arith.truncf %8 : vector<16x32xf32> to vector<16x32xbf16>
    %c0_6 = arith.constant 0 : index
    %c0_7 = arith.constant 0 : index
    %10 = vector.load %arg4[%c0_6, %c0_7] : memref<32x128xbf16, #tpu.memory_space<vmem>>, vector<32x128xbf16>
    %cst_8 = arith.constant dense<0.000000e+00> : vector<16x128xf32>
    %11 = tpu.matmul %9, %10, %cst_8 {dimension_numbers = #tpu.dot_dimension_numbers<[1], [0], [0], [1], [0, 0, 1, 1], [], []>} : vector<16x32xbf16>, vector<32x128xbf16>, vector<16x128xf32> -> vector<16x128xf32>
    %c0_9 = arith.constant 0 : index
    %c0_10 = arith.constant 0 : index
    %12 = vector.load %arg5[%c0_9, %c0_10] : memref<1x128xf32, #tpu.memory_space<vmem>>, vector<1x128xf32>
    %13 = vector.broadcast %12 : vector<1x128xf32> to vector<16x128xf32>
    %14 = arith.addf %11, %13 : vector<16x128xf32>
    %15 = tpu.iota {dimensions = array<i32: 1>} : vector<1x128xi32>
    %c32_i32 = arith.constant 32 : i32
    %16 = vector.broadcast %c32_i32 : i32 to vector<1x128xi32>
    %17 = arith.cmpi sge, %15, %16 : vector<1x128xi32>
    %c48_i32 = arith.constant 48 : i32
    %18 = vector.broadcast %c48_i32 : i32 to vector<1x128xi32>
    %19 = arith.cmpi slt, %15, %18 : vector<1x128xi32>
    %20 = arith.andi %17, %19 : vector<1x128xi1>
    %c64_i32 = arith.constant 64 : i32
    %21 = vector.broadcast %c64_i32 : i32 to vector<1x128xi32>
    %22 = arith.cmpi sge, %15, %21 : vector<1x128xi32>
    %c80_i32 = arith.constant 80 : i32
    %23 = vector.broadcast %c80_i32 : i32 to vector<1x128xi32>
    %24 = arith.cmpi slt, %15, %23 : vector<1x128xi32>
    %25 = arith.andi %22, %24 : vector<1x128xi1>
    %cst_11 = arith.constant 2.000000e+01 : f32
    %26 = vector.broadcast %cst_11 : f32 to vector<16x128xf32>
    %27 = arith.cmpf ogt, %14, %26 : vector<16x128xf32>
    %cst_12 = arith.constant 2.000000e+01 : f32
    %28 = vector.broadcast %cst_12 : f32 to vector<16x128xf32>
    %29 = arith.minimumf %14, %28 : vector<16x128xf32>
    %30 = math.exp %29 : vector<16x128xf32>
    %31 = math.log1p %30 : vector<16x128xf32>
    %32 = arith.select %27, %14, %31 : vector<16x128xi1>, vector<16x128xf32>
    %33 = vector.shape_cast %20 : vector<1x128xi1> to vector<1x128xi1>
    %34 = vector.broadcast %33 : vector<1x128xi1> to vector<16x128xi1>
    %35 = arith.select %34, %32, %14 : vector<16x128xi1>, vector<16x128xf32>
    %cst_13 = arith.constant 0.000000e+00 : f32
    %36 = vector.broadcast %cst_13 : f32 to vector<16x128xf32>
    %37 = arith.maximumf %35, %36 : vector<16x128xf32>
    %38 = vector.shape_cast %25 : vector<1x128xi1> to vector<1x128xi1>
    %39 = vector.broadcast %38 : vector<1x128xi1> to vector<16x128xi1>
    %40 = arith.select %39, %37, %35 : vector<16x128xi1>, vector<16x128xf32>
    %c0_14 = arith.constant 0 : index
    %c0_15 = arith.constant 0 : index
    %41 = vector.load %arg6[%c0_14, %c0_15] : memref<16x128xf32, #tpu.memory_space<vmem>>, vector<16x128xf32>
    tpu.vector_store %arg6[%c0_14, %c0_15], %40 {strides = array<i32>} : memref<16x128xf32, #tpu.memory_space<vmem>>, vector<16x128xf32>,
    return
  }
  func.func @transform_0(%arg0: i32) -> (i32, i32) {
    %c0_i32 = arith.constant 0 : i32
    %c0_i32_0 = arith.constant 0 : i32
    return %arg0, %c0_i32 : i32, i32
  }
  func.func @transform_1(%arg0: i32) -> (i32, i32) {
    %c0_i32 = arith.constant 0 : i32
    %c0_i32_0 = arith.constant 0 : i32
    %c0_i32_1 = arith.constant 0 : i32
    return %c0_i32, %c0_i32_0 : i32, i32
  }
  func.func @transform_2(%arg0: i32) -> (i32, i32) {
    %c0_i32 = arith.constant 0 : i32
    %c0_i32_0 = arith.constant 0 : i32
    %c0_i32_1 = arith.constant 0 : i32
    return %c0_i32, %c0_i32_0 : i32, i32
  }
  func.func @transform_3(%arg0: i32) -> (i32, i32) {
    %c0_i32 = arith.constant 0 : i32
    %c0_i32_0 = arith.constant 0 : i32
    %c0_i32_1 = arith.constant 0 : i32
    return %c0_i32, %c0_i32_0 : i32, i32
  }
  func.func @transform_4(%arg0: i32) -> (i32, i32) {
    %c0_i32 = arith.constant 0 : i32
    %c0_i32_0 = arith.constant 0 : i32
    %c0_i32_1 = arith.constant 0 : i32
    return %c0_i32, %c0_i32_0 : i32, i32
  }
  func.func @transform_5(%arg0: i32) -> (i32, i32) {
    %c0_i32 = arith.constant 0 : i32
    %c0_i32_0 = arith.constant 0 : i32
    return %arg0, %c0_i32 : i32, i32
  }
}

module attributes {stable_mosaic.version = 11 : i64} {
  func.func @_controller_kernel(%arg0: i32, %arg1: memref<16x32xf32, #tpu.memory_space<vmem>>, %arg2: memref<32x32xbf16, #tpu.memory_space<vmem>>, %arg3: memref<1x32xf32, #tpu.memory_space<vmem>>, %arg4: memref<32x128xbf16, #tpu.memory_space<vmem>>, %arg5: memref<1x128xf32, #tpu.memory_space<vmem>>, %arg6: memref<16x128xf32, #tpu.memory_space<vmem>>) attributes {dimension_semantics = [#tpu.dimension_semantics<parallel>], iteration_bounds = array<i64: 1>, scalar_prefetch = 0 : i64, scratch_operands = 0 : i64, tpu.core_type = #tpu.core_type<tc>, window_params = [{transform_indices = @transform_0, window_bounds = array<i64: 16, 32>}, {pipeline_mode = #tpu.pipeline_mode<synchronous>, transform_indices = @transform_1, window_bounds = array<i64: 32, 32>}, {pipeline_mode = #tpu.pipeline_mode<synchronous>, transform_indices = @transform_2, window_bounds = array<i64: 1, 32>}, {pipeline_mode = #tpu.pipeline_mode<synchronous>, transform_indices = @transform_3, window_bounds = array<i64: 32, 128>}, {pipeline_mode = #tpu.pipeline_mode<synchronous>, transform_indices = @transform_4, window_bounds = array<i64: 1, 128>}, {transform_indices = @transform_5, window_bounds = array<i64: 16, 128>}]} {
    %c0 = arith.constant 0 : index
    %c0_0 = arith.constant 0 : index
    %0 = vector.load %arg1[%c0, %c0_0] : memref<16x32xf32, #tpu.memory_space<vmem>>, vector<16x32xf32>
    %1 = arith.truncf %0 : vector<16x32xf32> to vector<16x32xbf16>
    %c0_1 = arith.constant 0 : index
    %c0_2 = arith.constant 0 : index
    %2 = vector.load %arg2[%c0_1, %c0_2] : memref<32x32xbf16, #tpu.memory_space<vmem>>, vector<32x32xbf16>
    %cst = arith.constant dense<0.000000e+00> : vector<16x32xf32>
    %3 = tpu.matmul %1, %2, %cst {dimension_numbers = #tpu.dot_dimension_numbers<[1], [0], [0], [1], [0, 0, 1, 1], [], []>} : vector<16x32xbf16>, vector<32x32xbf16>, vector<16x32xf32> -> vector<16x32xf32>
    %c0_3 = arith.constant 0 : index
    %c0_4 = arith.constant 0 : index
    %4 = vector.load %arg3[%c0_3, %c0_4] : memref<1x32xf32, #tpu.memory_space<vmem>>, vector<1x32xf32>
    %5 = vector.broadcast %4 : vector<1x32xf32> to vector<16x32xf32>
    %6 = arith.addf %3, %5 : vector<16x32xf32>
    %cst_5 = arith.constant 0.000000e+00 : f32
    %7 = vector.broadcast %cst_5 : f32 to vector<16x32xf32>
    %8 = arith.maximumf %6, %7 : vector<16x32xf32>
    %9 = arith.truncf %8 : vector<16x32xf32> to vector<16x32xbf16>
    %c0_6 = arith.constant 0 : index
    %c0_7 = arith.constant 0 : index
    %10 = vector.load %arg4[%c0_6, %c0_7] : memref<32x128xbf16, #tpu.memory_space<vmem>>, vector<32x128xbf16>
    %cst_8 = arith.constant dense<0.000000e+00> : vector<16x128xf32>
    %11 = tpu.matmul %9, %10, %cst_8 {dimension_numbers = #tpu.dot_dimension_numbers<[1], [0], [0], [1], [0, 0, 1, 1], [], []>} : vector<16x32xbf16>, vector<32x128xbf16>, vector<16x128xf32> -> vector<16x128xf32>
    %c0_9 = arith.constant 0 : index
    %c0_10 = arith.constant 0 : index
    %12 = vector.load %arg5[%c0_9, %c0_10] : memref<1x128xf32, #tpu.memory_space<vmem>>, vector<1x128xf32>
    %13 = vector.broadcast %12 : vector<1x128xf32> to vector<16x128xf32>
    %14 = arith.addf %11, %13 : vector<16x128xf32>
    %15 = tpu.iota {dimensions = array<i32: 1>} : vector<1x128xi32>
    %c32_i32 = arith.constant 32 : i32
    %16 = vector.broadcast %c32_i32 : i32 to vector<1x128xi32>
    %17 = arith.cmpi sge, %15, %16 : vector<1x128xi32>
    %c48_i32 = arith.constant 48 : i32
    %18 = vector.broadcast %c48_i32 : i32 to vector<1x128xi32>
    %19 = arith.cmpi slt, %15, %18 : vector<1x128xi32>
    %20 = arith.andi %17, %19 : vector<1x128xi1>
    %c64_i32 = arith.constant 64 : i32
    %21 = vector.broadcast %c64_i32 : i32 to vector<1x128xi32>
    %22 = arith.cmpi sge, %15, %21 : vector<1x128xi32>
    %c80_i32 = arith.constant 80 : i32
    %23 = vector.broadcast %c80_i32 : i32 to vector<1x128xi32>
    %24 = arith.cmpi slt, %15, %23 : vector<1x128xi32>
    %25 = arith.andi %22, %24 : vector<1x128xi1>
    %cst_11 = arith.constant 2.000000e+01 : f32
    %26 = vector.broadcast %cst_11 : f32 to vector<16x128xf32>
    %27 = arith.cmpf ogt, %14, %26 : vector<16x128xf32>
    %cst_12 = arith.constant 2.000000e+01 : f32
    %28 = vector.broadcast %cst_12 : f32 to vector<16x128xf32>
    %29 = arith.minimumf %14, %28 : vector<16x128xf32>
    %30 = math.exp %29 : vector<16x128xf32>
    %31 = math.log1p %30 : vector<16x128xf32>
    %32 = arith.select %27, %14, %31 : vector<16x128xi1>, vector<16x128xf32>
    %33 = vector.shape_cast %20 : vector<1x128xi1> to vector<1x128xi1>
    %34 = vector.broadcast %33 : vector<1x128xi1> to vector<16x128xi1>
    %35 = arith.select %34, %32, %14 : vector<16x128xi1>, vector<16x128xf32>
    %cst_13 = arith.constant 0.000000e+00 : f32
    %36 = vector.broadcast %cst_13 : f32 to vector<16x128xf32>
    %37 = arith.maximumf %35, %36 : vector<16x128xf32>
    %38 = vector.shape_cast %25 : vector<1x128xi1> to vector<1x128xi1>
    %39 = vector.broadcast %38 : vector<1x128xi1> to vector<16x128xi1>
    %40 = arith.select %39, %37, %35 : vector<16x128xi1>, vector<16x128xf32>
    %c0_14 = arith.constant 0 : index
    %c0_15 = arith.constant 0 : index
    %41 = vector.load %arg6[%c0_14, %c0_15] : memref<16x128xf32, #tpu.memory_space<vmem>>, vector<16x128xf32>
    tpu.vector_store %arg6[%c0_14, %c0_15], %40 {strides = array<i32>} : memref<16x128xf32, #tpu.memory_space<vmem>>, vector<16x128xf32>,
    return
  }
  func.func @transform_0(%arg0: i32) -> (i32, i32) {
    %c0_i32 = arith.constant 0 : i32
    %c0_i32_0 = arith.constant 0 : i32
    return %arg0, %c0_i32 : i32, i32
  }
  func.func @transform_1(%arg0: i32) -> (i32, i32) {
    %c0_i32 = arith.constant 0 : i32
    %c0_i32_0 = arith.constant 0 : i32
    %c0_i32_1 = arith.constant 0 : i32
    return %c0_i32, %c0_i32_0 : i32, i32
  }
  func.func @transform_2(%arg0: i32) -> (i32, i32) {
    %c0_i32 = arith.constant 0 : i32
    %c0_i32_0 = arith.constant 0 : i32
    %c0_i32_1 = arith.constant 0 : i32
    return %c0_i32, %c0_i32_0 : i32, i32
  }
  func.func @transform_3(%arg0: i32) -> (i32, i32) {
    %c0_i32 = arith.constant 0 : i32
    %c0_i32_0 = arith.constant 0 : i32
    %c0_i32_1 = arith.constant 0 : i32
    return %c0_i32, %c0_i32_0 : i32, i32
  }
  func.func @transform_4(%arg0: i32) -> (i32, i32) {
    %c0_i32 = arith.constant 0 : i32
    %c0_i32_0 = arith.constant 0 : i32
    %c0_i32_1 = arith.constant 0 : i32
    return %c0_i32, %c0_i32_0 : i32, i32
  }
  func.func @transform_5(%arg0: i32) -> (i32, i32) {
    %c0_i32 = arith.constant 0 : i32
    %c0_i32_0 = arith.constant 0 : i32
    return %arg0, %c0_i32 : i32, i32
  }
}

</mosaic_0001>

<llo_original>
// kernel: tpu_custom_call.1
$region0: #{tpu_custom_call.1}
  #allocation0 [shape = 'u32[]', space=smem, size = 0x4, offset = 0x4, fixed_abs, tag = 'smem constant byte address 0x4 - core index']
  #allocation1 [shape = 'u32[144,128]{1,0:T(1,128)}', space=vmem, size = 0x12000, scoped, tag = 'internal scratch']
  %s0 = inlined_call_operand.hbm [shape: f32[16,32], index: 0, kind: input, shape index: {}]
  %s1 = inlined_call_operand.hbm [shape: bf16[32,32], index: 1, kind: input, shape index: {}]
  %s2 = inlined_call_operand.vmem [shape: f32[1,32], index: 2, kind: input, shape index: {}]
  %s3 = inlined_call_operand.hbm [shape: bf16[32,128], index: 3, kind: input, shape index: {}]
  %s4 = inlined_call_operand.vmem [shape: f32[1,128], index: 4, kind: input, shape index: {}]
  %s5 = inlined_call_operand.hbm [shape: f32[16,128], index: 5, kind: output, shape index: {}]
  %s6 = sld [smem:[#allocation0]]
  $region42: #{tpu_custom_call.1} parent=0
    _
  %s8 = ssub.s32 1, %s6
  %s9 = scalar_select 0, %s8, %s6
  $region1: #{tpu_custom_call.1} parent=0
    #allocation2 [shape = 'u8[8192]{0}', space=vmem, size = 0x2000, scoped, tag = 'input window, operand 0, single buffered']
    #allocation3 [shape = 's32[1]{0}', space=sflag, size = 0x4, scoped, tag = 'scoped memory for tpu_custom_call.1']
    #allocation4 [shape = 's32[1]{0}', space=sflag, size = 0x4, scoped, tag = 'scoped memory for tpu_custom_call.1']
    #allocation5 [shape = 'u8[8192]{0}', space=vmem, size = 0x2000, scoped, tag = 'input window, operand 1, single buffered']
    #allocation6 [shape = 's32[1]{0}', space=sflag, size = 0x4, scoped, tag = 'scoped memory for tpu_custom_call.1']
    #allocation7 [shape = 'u8[8192]{0}', space=vmem, size = 0x2000, scoped, tag = 'input window, operand 3, single buffered']
    #allocation8 [shape = 'u8[8192]{0}', space=vmem, size = 0x2000, scoped, tag = 'output window, operand 0, single buffered']
    %10 = vsyncpa [#allocation3], 0
    %11 = vsyncpa [#allocation6], 0
    %12 = vsyncpa [#allocation4], 0
    // Predicated region
    $region2: #{tpu_custom_call.1} parent=1 // pred_check
      _
    $region3: #{tpu_custom_call.1} parent=1 // pred_check_branch
      %14 = sbr.rel (0) target = $region5
    $region4: #{tpu_custom_call.1} parent=1 // pred_region
      %s16 = ssub.s32 256, 256
      %17 = vsyncadd [#allocation3], %s16
      %s18 = sshll.u32 [#allocation2], 4
      %s19 = int_to_ptr.vmem [resolvable:$true] %s18
      %24 = dma.hbm_to_vmem [thread:$0]  %s0, 256, %s19, [#allocation3], 128, 128, 8
    $region5: #{tpu_custom_call.1} parent=1 // pred_fallthru
      _
    // Predicated region
    $region6: #{tpu_custom_call.1} parent=1 // pred_check
      _
    $region7: #{tpu_custom_call.1} parent=1 // pred_check_branch
      %26 = sbr.rel (0) target = $region9
    $region8: #{tpu_custom_call.1} parent=1 // pred_region
      %s28 = ssub.s32 256, 256
      %29 = vsyncadd [#allocation6], %s28
      %s30 = sshll.u32 [#allocation5], 4
      %s31 = int_to_ptr.vmem [resolvable:$true] %s30
      %36 = dma.hbm_to_vmem [thread:$0]  %s1, 256, %s31, [#allocation6], 64, 64, 4
    $region9: #{tpu_custom_call.1} parent=1 // pred_fallthru
      _
    // Predicated region
    $region10: #{tpu_custom_call.1} parent=1 // pred_check
      _
    $region11: #{tpu_custom_call.1} parent=1 // pred_check_branch
      %38 = sbr.rel (0) target = $region13
    $region12: #{tpu_custom_call.1} parent=1 // pred_region
      _
    $region13: #{tpu_custom_call.1} parent=1 // pred_fallthru
      _
    // Predicated region
    $region14: #{tpu_custom_call.1} parent=1 // pred_check
      _
    $region15: #{tpu_custom_call.1} parent=1 // pred_check_branch
      %40 = sbr.rel (0) target = $region17
    $region16: #{tpu_custom_call.1} parent=1 // pred_region
      %s42 = ssub.s32 256, 256
      %43 = vsyncadd [#allocation6], %s42
      %s44 = sshll.u32 [#allocation7], 4
      %s45 = int_to_ptr.vmem [resolvable:$true] %s44
      %50 = dma.hbm_to_vmem [thread:$0]  %s3, 256, %s45, [#allocation6], 64, 64, 4
    $region17: #{tpu_custom_call.1} parent=1 // pred_fallthru
      _
    // Predicated region
    $region18: #{tpu_custom_call.1} parent=1 // pred_check
      _
    $region19: #{tpu_custom_call.1} parent=1 // pred_check_branch
      %52 = sbr.rel (0) target = $region21
    $region20: #{tpu_custom_call.1} parent=1 // pred_region
      _
    $region21: #{tpu_custom_call.1} parent=1 // pred_fallthru
      _
    // Predicated region
    $region22: #{tpu_custom_call.1} parent=1 // pred_check
      _
    $region23: #{tpu_custom_call.1} parent=1 // pred_check_branch
      %54 = sbr.rel (0) target = $region25
    $region24: #{tpu_custom_call.1} parent=1 // pred_region
      %55 = dma.done [#allocation3], 256
    $region25: #{tpu_custom_call.1} parent=1 // pred_fallthru
      _
    // Predicated region
    $region26: #{tpu_custom_call.1} parent=1 // pred_check
      _
    $region27: #{tpu_custom_call.1} parent=1 // pred_check_branch
      %57 = sbr.rel (0) target = $region29
    $region28: #{tpu_custom_call.1} parent=1 // pred_region
      %58 = dma.done [#allocation6], 256
    $region29: #{tpu_custom_call.1} parent=1 // pred_fallthru
      _
    // Predicated region
    $region30: #{tpu_custom_call.1} parent=1 // pred_check
      _
    $region31: #{tpu_custom_call.1} parent=1 // pred_check_branch
      %60 = sbr.rel (0) target = $region33
    $region32: #{tpu_custom_call.1} parent=1 // pred_region
      %61 = dma.done [#allocation6], 256
    $region33: #{tpu_custom_call.1} parent=1 // pred_fallthru
      _
    %v63 = vld [vmem:[#allocation2] sm:$0xff]
    %v64 = vld [vmem:[#allocation2 + $0x8] sm:$0xff]
    %v65 = vpack.c.bf16 %v64, %v63
    %v66 = vld [vmem:[#allocation5] sm:$0xf]
    %v67 = vld [vmem:[#allocation5 + $0x4] sm:$0xf]
    %v68 = vld [vmem:[#allocation5 + $0x8] sm:$0xf]
    %v69 = vld [vmem:[#allocation5 + $0xc] sm:$0xf]
    %v70 = vld [vmem:[%s2] sm:$0x1]
    %v72 = vlaneseq
    %v73 = vshrl.u32 %v72, 7
    %v74 = vsub.s32 0, %v73
    %v75 = vrot.slane %v70, %v74
    %v81 = vunpack.c.l.b16 %v66
    %v82 = vunpack.c.l.b16 %v67
    %v83 = vunpack.c.l.b16 %v68
    %v84 = vunpack.c.l.b16 %v69
    %v85 = vpack.c.b16 %v82, %v81
    %v86 = vpack.c.b16 %v84, %v83
    %vm89 = vcmask 261120
    %v91 = vsel %vm89, %v65, 0
    %93 = vmatprep.subr.bf16.mxu0 0
    %94 = vmatpush1.bf16.msra.mxu0 0
    %95 = vmatprep.subr.bf16.mxu0 0
    %96 = vmatpush1.bf16.msra.mxu0 0
    %97 = vmatprep.subr.bf16.mxu0 0
    %98 = vmatpush1.bf16.msra.mxu0 0
    %99 = vmatprep.subr.bf16.mxu0 0
    %100 = vmatpush1.bf16.msra.mxu0 0
    %101 = vmatprep.subr.bf16.mxu0 0
    %102 = vmatpush1.bf16.msra.mxu0 0
    %103 = vmatprep.subr.bf16.mxu0 0
    %104 = vmatpush1.bf16.msra.mxu0 0
    %105 = vmatprep.subr.bf16.mxu0 0
    %106 = vmatpush1.bf16.msra.mxu0 %v86
    %107 = vmatprep.subr.bf16.mxu0 0
    %108 = vmatpush1.bf16.msra.mxu0 %v85
    %109 = vmatprep.subr.bf16.mxu0 0
    %110 = vmatpush2.bf16.msra.mxu0 0
    %111 = vmatprep.subr.bf16.mxu0 0
    %112 = vmatpush2.bf16.msra.mxu0 0
    %113 = vmatprep.subr.bf16.mxu0 0
    %114 = vmatpush2.bf16.msra.mxu0 0
    %115 = vmatprep.subr.bf16.mxu0 0
    %116 = vmatpush2.bf16.msra.mxu0 0
    %117 = vmatprep.subr.bf16.mxu0 0
    %118 = vmatpush2.bf16.msra.mxu0 0
    %119 = vmatprep.subr.bf16.mxu0 0
    %120 = vmatpush2.bf16.msra.mxu0 0
    %121 = vmatprep.subr.bf16.mxu0 0
    %122 = vmatpush2.bf16.msra.mxu0 0
    %123 = vmatprep.subr.bf16.mxu0 0
    %124 = vmatpush2.bf16.msra.mxu0 0
    %125 = vmatprep.mubr.bf16.mxu0 0
    %126 = vmatmul.mubr.bf16.gmra.mxu0 %v91
    %v127 = vpop.f32.mrf.mxu0
    %v128 = vadd.f32 %v75, %v127
    %v129 = vpop.f32.mrf.mxu0
    %v130 = vpop.f32.mrf.mxu0
    %v131 = vadd.f32 %v75, %v130
    %v132 = vpop.f32.mrf.mxu0
    %133 = vdwg.mxu0
    %v134 = vmax.f32 %v128, 0.0
    %v135 = vmax.f32 %v131, 0.0
    %v136 = vpack.c.bf16 %v135, %v134
    %v137 = vld [vmem:[#allocation7] sm:$0xf]
    %v138 = vld [vmem:[#allocation7 + $0x4] sm:$0xf]
    %v139 = vld [vmem:[#allocation7 + $0x8] sm:$0xf]
    %v140 = vld [vmem:[#allocation7 + $0xc] sm:$0xf]
    %v141 = vld [vmem:[%s4] sm:$0x1]
    %v143 = vlaneseq
    %v144 = vshrl.u32 %v143, 7
    %v145 = vsub.s32 0, %v144
    %v146 = vrot.slane %v141, %v145
    %v152 = vunpack.c.l.b16 %v137
    %v153 = vunpack.c.l.b16 %v138
    %v154 = vunpack.c.l.b16 %v139
    %v155 = vunpack.c.l.b16 %v140
    %v156 = vpack.c.b16 %v153, %v152
    %v157 = vpack.c.b16 %v155, %v154
    %v161 = vsel %vm89, %v136, 0
    %163 = vmatprep.subr.bf16.mxu0 0
    %164 = vmatpush1.bf16.msra.mxu0 0
    %165 = vmatprep.subr.bf16.mxu0 0
    %166 = vmatpush1.bf16.msra.mxu0 0
    %167 = vmatprep.subr.bf16.mxu0 0
    %168 = vmatpush1.bf16.msra.mxu0 0
    %169 = vmatprep.subr.bf16.mxu0 0
    %170 = vmatpush1.bf16.msra.mxu0 0
    %171 = vmatprep.subr.bf16.mxu0 0
    %172 = vmatpush1.bf16.msra.mxu0 0
    %173 = vmatprep.subr.bf16.mxu0 0
    %174 = vmatpush1.bf16.msra.mxu0 0
    %175 = vmatprep.subr.bf16.mxu0 0
    %176 = vmatpush1.bf16.msra.mxu0 %v157
    %177 = vmatprep.subr.bf16.mxu0 0
    %178 = vmatpush1.bf16.msra.mxu0 %v156
    %179 = vmatprep.subr.bf16.mxu0 0
    %180 = vmatpush2.bf16.msra.mxu0 0
    %181 = vmatprep.subr.bf16.mxu0 0
    %182 = vmatpush2.bf16.msra.mxu0 0
    %183 = vmatprep.subr.bf16.mxu0 0
    %184 = vmatpush2.bf16.msra.mxu0 0
    %185 = vmatprep.subr.bf16.mxu0 0
    %186 = vmatpush2.bf16.msra.mxu0 0
    %187 = vmatprep.subr.bf16.mxu0 0
    %188 = vmatpush2.bf16.msra.mxu0 0
    %189 = vmatprep.subr.bf16.mxu0 0
    %190 = vmatpush2.bf16.msra.mxu0 0
    %191 = vmatprep.subr.bf16.mxu0 0
    %192 = vmatpush2.bf16.msra.mxu0 0
    %193 = vmatprep.subr.bf16.mxu0 0
    %194 = vmatpush2.bf16.msra.mxu0 0
    %195 = vmatprep.mubr.bf16.mxu0 0
    %196 = vmatmul.mubr.bf16.gmra.mxu0 %v161
    %v197 = vpop.f32.mrf.mxu0
    %v198 = vadd.f32 %v146, %v197
    %v199 = vpop.f32.mrf.mxu0
    %v200 = vpop.f32.mrf.mxu0
    %v201 = vadd.f32 %v146, %v200
    %v202 = vpop.f32.mrf.mxu0
    %203 = vdwg.mxu0
    %v204 = vlaneseq
    %v205 = vand.u32 %v204, 127
    %vm206 = vcmp.ge.s32.totalorder %v205, 32
    %vm207 = vcmp.lt.s32.totalorder %v205, 48
    %vm208 = vmand %vm206, %vm207
    %vm209 = vcmp.ge.s32.totalorder %v205, 64
    %vm210 = vcmp.lt.s32.totalorder %v205, 80
    %vm211 = vmand %vm209, %vm210
    %vm212 = vcmp.gt.f32.partialorder %v198, 20.0
    %vm213 = vcmp.gt.f32.partialorder %v201, 20.0
    %v214 = vmin.f32 %v198, 20.0
    %v215 = vmin.f32 %v201, 20.0
    %v216 = vmul.f32 %v214, 1.442695
    %v217 = vpow.pop %v216
    %v218 = vmul.f32 %v215, 1.442695
    %v219 = vpow.pop %v218
    %v220 = vadd.f32 %v217, 1.0
    %v221 = vlog2.pop %v220
    %v222 = vmul.f32 %v221, 0.6931472
    %v223 = vmul.f32 -0.5, %v217
    %v224 = vadd.f32 %v223, 1.0
    %v225 = vmul.f32 %v224, %v217
    %v226 = vand.u32 2147483647, %v217
    %vm227 = vcmp.lt.f32.partialorder %v226, 0.0004427343
    %v228 = vsel %vm227, %v225, %v222
    %v229 = vadd.f32 %v219, 1.0
    %v230 = vlog2.pop %v229
    %v231 = vmul.f32 %v230, 0.6931472
    %v232 = vmul.f32 -0.5, %v219
    %v233 = vadd.f32 %v232, 1.0
    %v234 = vmul.f32 %v233, %v219
    %v235 = vand.u32 2147483647, %v219
    %vm236 = vcmp.lt.f32.partialorder %v235, 0.0004427343
    %v237 = vsel %vm236, %v234, %v231
    %v238 = vsel %vm212, %v198, %v228
    %v239 = vsel %vm213, %v201, %v237
    %v240 = vsel %vm208, 1, 0
    %vm241 = vcmp.eq.s32.totalorder %v240, 1
    %v242 = vsel %vm241, %v238, %v198
    %v243 = vsel %vm241, %v239, %v201
    %v244 = vmax.f32 %v242, 0.0
    %v245 = vmax.f32 %v243, 0.0
    %v246 = vsel %vm211, 1, 0
    %vm247 = vcmp.eq.s32.totalorder %v246, 1
    %v248 = vsel %vm247, %v244, %v242
    %v249 = vsel %vm247, %v245, %v243
    %250 = vst [vmem:[#allocation8] sm:$0xff] %v248
    %251 = vst [vmem:[#allocation8 + $0x8] sm:$0xff] %v249
    // Predicated region
    $region34: #{tpu_custom_call.1} parent=1 // pred_check
      _
    $region35: #{tpu_custom_call.1} parent=1 // pred_check_branch
      %253 = sbr.rel (0) target = $region37
    $region36: #{tpu_custom_call.1} parent=1 // pred_region
      %s255 = ssub.s32 256, 256
      %256 = vsyncadd [#allocation4], %s255
      %s257 = sshll.u32 [#allocation8], 4
      %s258 = int_to_ptr.vmem [resolvable:$true] %s257
      %263 = dma.vmem_to_hbm [thread:$0]  %s258, 256, %s5, [#allocation4], 128, 128, 8
    $region37: #{tpu_custom_call.1} parent=1 // pred_fallthru
      _
    // Predicated region
    $region38: #{tpu_custom_call.1} parent=1 // pred_check
      _
    $region39: #{tpu_custom_call.1} parent=1 // pred_check_branch
      %265 = sbr.rel (0) target = $region41
    $region40: #{tpu_custom_call.1} parent=1 // pred_region
      %266 = dma.done [#allocation4], 256
    $region41: #{tpu_custom_call.1} parent=1 // pred_fallthru
      _
    %267 = vsyncpa [#allocation3], 1
    %268 = vsyncpa [#allocation6], 1
    %269 = vsyncpa [#allocation4], 1

// kernel: tpu_custom_call.1
$region0: #{tpu_custom_call.1}
  #allocation0 [shape = 'u32[]', space=smem, size = 0x4, offset = 0x4, fixed_abs, tag = 'smem constant byte address 0x4 - core index']
  #allocation1 [shape = 'u32[144,128]{1,0:T(1,128)}', space=vmem, size = 0x12000, scoped, tag = 'internal scratch']
  %s0 = inlined_call_operand.hbm [shape: f32[16,32], index: 0, kind: input, shape index: {}]
  %s1 = inlined_call_operand.hbm [shape: bf16[32,32], index: 1, kind: input, shape index: {}]
  %s2 = inlined_call_operand.vmem [shape: f32[1,32], index: 2, kind: input, shape index: {}]
  %s3 = inlined_call_operand.hbm [shape: bf16[32,128], index: 3, kind: input, shape index: {}]
  %s4 = inlined_call_operand.vmem [shape: f32[1,128], index: 4, kind: input, shape index: {}]
  %s5 = inlined_call_operand.hbm [shape: f32[16,128], index: 5, kind: output, shape index: {}]
  %s6 = sld [smem:[#allocation0]]
  $region42: #{tpu_custom_call.1} parent=0
    _
  %s8 = ssub.s32 1, %s6
  %s9 = scalar_select 0, %s8, %s6
  $region1: #{tpu_custom_call.1} parent=0
    #allocation2 [shape = 'u8[8192]{0}', space=vmem, size = 0x2000, scoped, tag = 'input window, operand 0, single buffered']
    #allocation3 [shape = 's32[1]{0}', space=sflag, size = 0x4, scoped, tag = 'scoped memory for tpu_custom_call.1']
    #allocation4 [shape = 's32[1]{0}', space=sflag, size = 0x4, scoped, tag = 'scoped memory for tpu_custom_call.1']
    #allocation5 [shape = 'u8[8192]{0}', space=vmem, size = 0x2000, scoped, tag = 'input window, operand 1, single buffered']
    #allocation6 [shape = 's32[1]{0}', space=sflag, size = 0x4, scoped, tag = 'scoped memory for tpu_custom_call.1']
    #allocation7 [shape = 'u8[8192]{0}', space=vmem, size = 0x2000, scoped, tag = 'input window, operand 3, single buffered']
    #allocation8 [shape = 'u8[8192]{0}', space=vmem, size = 0x2000, scoped, tag = 'output window, operand 0, single buffered']
    %10 = vsyncpa [#allocation3], 0
    %11 = vsyncpa [#allocation6], 0
    %12 = vsyncpa [#allocation4], 0
    // Predicated region
    $region2: #{tpu_custom_call.1} parent=1 // pred_check
      _
    $region3: #{tpu_custom_call.1} parent=1 // pred_check_branch
      %14 = sbr.rel (0) target = $region5
    $region4: #{tpu_custom_call.1} parent=1 // pred_region
      %s16 = ssub.s32 256, 256
      %17 = vsyncadd [#allocation3], %s16
      %s18 = sshll.u32 [#allocation2], 4
      %s19 = int_to_ptr.vmem [resolvable:$true] %s18
      %24 = dma.hbm_to_vmem [thread:$0]  %s0, 256, %s19, [#allocation3], 128, 128, 8
    $region5: #{tpu_custom_call.1} parent=1 // pred_fallthru
      _
    // Predicated region
    $region6: #{tpu_custom_call.1} parent=1 // pred_check
      _
    $region7: #{tpu_custom_call.1} parent=1 // pred_check_branch
      %26 = sbr.rel (0) target = $region9
    $region8: #{tpu_custom_call.1} parent=1 // pred_region
      %s28 = ssub.s32 256, 256
      %29 = vsyncadd [#allocation6], %s28
      %s30 = sshll.u32 [#allocation5], 4
      %s31 = int_to_ptr.vmem [resolvable:$true] %s30
      %36 = dma.hbm_to_vmem [thread:$0]  %s1, 256, %s31, [#allocation6], 64, 64, 4
    $region9: #{tpu_custom_call.1} parent=1 // pred_fallthru
      _
    // Predicated region
    $region10: #{tpu_custom_call.1} parent=1 // pred_check
      _
    $region11: #{tpu_custom_call.1} parent=1 // pred_check_branch
      %38 = sbr.rel (0) target = $region13
    $region12: #{tpu_custom_call.1} parent=1 // pred_region
      _
    $region13: #{tpu_custom_call.1} parent=1 // pred_fallthru
      _
    // Predicated region
    $region14: #{tpu_custom_call.1} parent=1 // pred_check
      _
    $region15: #{tpu_custom_call.1} parent=1 // pred_check_branch
      %40 = sbr.rel (0) target = $region17
    $region16: #{tpu_custom_call.1} parent=1 // pred_region
      %s42 = ssub.s32 256, 256
      %43 = vsyncadd [#allocation6], %s42
      %s44 = sshll.u32 [#allocation7], 4
      %s45 = int_to_ptr.vmem [resolvable:$true] %s44
      %50 = dma.hbm_to_vmem [thread:$0]  %s3, 256, %s45, [#allocation6], 64, 64, 4
    $region17: #{tpu_custom_call.1} parent=1 // pred_fallthru
      _
    // Predicated region
    $region18: #{tpu_custom_call.1} parent=1 // pred_check
      _
    $region19: #{tpu_custom_call.1} parent=1 // pred_check_branch
      %52 = sbr.rel (0) target = $region21
    $region20: #{tpu_custom_call.1} parent=1 // pred_region
      _
    $region21: #{tpu_custom_call.1} parent=1 // pred_fallthru
      _
    // Predicated region
    $region22: #{tpu_custom_call.1} parent=1 // pred_check
      _
    $region23: #{tpu_custom_call.1} parent=1 // pred_check_branch
      %54 = sbr.rel (0) target = $region25
    $region24: #{tpu_custom_call.1} parent=1 // pred_region
      %55 = dma.done [#allocation3], 256
    $region25: #{tpu_custom_call.1} parent=1 // pred_fallthru
      _
    // Predicated region
    $region26: #{tpu_custom_call.1} parent=1 // pred_check
      _
    $region27: #{tpu_custom_call.1} parent=1 // pred_check_branch
      %57 = sbr.rel (0) target = $region29
    $region28: #{tpu_custom_call.1} parent=1 // pred_region
      %58 = dma.done [#allocation6], 256
    $region29: #{tpu_custom_call.1} parent=1 // pred_fallthru
      _
    // Predicated region
    $region30: #{tpu_custom_call.1} parent=1 // pred_check
      _
    $region31: #{tpu_custom_call.1} parent=1 // pred_check_branch
      %60 = sbr.rel (0) target = $region33
    $region32: #{tpu_custom_call.1} parent=1 // pred_region
      %61 = dma.done [#allocation6], 256
    $region33: #{tpu_custom_call.1} parent=1 // pred_fallthru
      _
    %v63 = vld [vmem:[#allocation2] sm:$0xff]
    %v64 = vld [vmem:[#allocation2 + $0x8] sm:$0xff]
    %v65 = vpack.c.bf16 %v64, %v63
    %v66 = vld [vmem:[#allocation5] sm:$0xf]
    %v67 = vld [vmem:[#allocation5 + $0x4] sm:$0xf]
    %v68 = vld [vmem:[#allocation5 + $0x8] sm:$0xf]
    %v69 = vld [vmem:[#allocation5 + $0xc] sm:$0xf]
    %v70 = vld [vmem:[%s2] sm:$0x1]
    %v72 = vlaneseq
    %v73 = vshrl.u32 %v72, 7
    %v74 = vsub.s32 0, %v73
    %v75 = vrot.slane %v70, %v74
    %v81 = vunpack.c.l.b16 %v66
    %v82 = vunpack.c.l.b16 %v67
    %v83 = vunpack.c.l.b16 %v68
    %v84 = vunpack.c.l.b16 %v69
    %v85 = vpack.c.b16 %v82, %v81
    %v86 = vpack.c.b16 %v84, %v83
    %vm89 = vcmask 261120
    %v91 = vsel %vm89, %v65, 0
    %93 = vmatprep.subr.bf16.mxu0 0
    %94 = vmatpush1.bf16.msra.mxu0 0
    %95 = vmatprep.subr.bf16.mxu0 0
    %96 = vmatpush1.bf16.msra.mxu0 0
    %97 = vmatprep.subr.bf16.mxu0 0
    %98 = vmatpush1.bf16.msra.mxu0 0
    %99 = vmatprep.subr.bf16.mxu0 0
    %100 = vmatpush1.bf16.msra.mxu0 0
    %101 = vmatprep.subr.bf16.mxu0 0
    %102 = vmatpush1.bf16.msra.mxu0 0
    %103 = vmatprep.subr.bf16.mxu0 0
    %104 = vmatpush1.bf16.msra.mxu0 0
    %105 = vmatprep.subr.bf16.mxu0 0
    %106 = vmatpush1.bf16.msra.mxu0 %v86
    %107 = vmatprep.subr.bf16.mxu0 0
    %108 = vmatpush1.bf16.msra.mxu0 %v85
    %109 = vmatprep.subr.bf16.mxu0 0
    %110 = vmatpush2.bf16.msra.mxu0 0
    %111 = vmatprep.subr.bf16.mxu0 0
    %112 = vmatpush2.bf16.msra.mxu0 0
    %113 = vmatprep.subr.bf16.mxu0 0
    %114 = vmatpush2.bf16.msra.mxu0 0
    %115 = vmatprep.subr.bf16.mxu0 0
    %116 = vmatpush2.bf16.msra.mxu0 0
    %117 = vmatprep.subr.bf16.mxu0 0
    %118 = vmatpush2.bf16.msra.mxu0 0
    %119 = vmatprep.subr.bf16.mxu0 0
    %120 = vmatpush2.bf16.msra.mxu0 0
    %121 = vmatprep.subr.bf16.mxu0 0
    %122 = vmatpush2.bf16.msra.mxu0 0
    %123 = vmatprep.subr.bf16.mxu0 0
    %124 = vmatpush2.bf16.msra.mxu0 0
    %125 = vmatprep.mubr.bf16.mxu0 0
    %126 = vmatmul.mubr.bf16.gmra.mxu0 %v91
    %v127 = vpop.f32.mrf.mxu0
    %v128 = vadd.f32 %v75, %v127
    %v129 = vpop.f32.mrf.mxu0
    %v130 = vpop.f32.mrf.mxu0
    %v131 = vadd.f32 %v75, %v130
    %v132 = vpop.f32.mrf.mxu0
    %133 = vdwg.mxu0
    %v134 = vmax.f32 %v128, 0.0
    %v135 = vmax.f32 %v131, 0.0
    %v136 = vpack.c.bf16 %v135, %v134
    %v137 = vld [vmem:[#allocation7] sm:$0xf]
    %v138 = vld [vmem:[#allocation7 + $0x4] sm:$0xf]
    %v139 = vld [vmem:[#allocation7 + $0x8] sm:$0xf]
    %v140 = vld [vmem:[#allocation7 + $0xc] sm:$0xf]
    %v141 = vld [vmem:[%s4] sm:$0x1]
    %v143 = vlaneseq
    %v144 = vshrl.u32 %v143, 7
    %v145 = vsub.s32 0, %v144
    %v146 = vrot.slane %v141, %v145
    %v152 = vunpack.c.l.b16 %v137
    %v153 = vunpack.c.l.b16 %v138
    %v154 = vunpack.c.l.b16 %v139
    %v155 = vunpack.c.l.b16 %v140
    %v156 = vpack.c.b16 %v153, %v152
    %v157 = vpack.c.b16 %v155, %v154
    %v161 = vsel %vm89, %v136, 0
    %163 = vmatprep.subr.bf16.mxu0 0
    %164 = vmatpush1.bf16.msra.mxu0 0
    %165 = vmatprep.subr.bf16.mxu0 0
    %166 = vmatpush1.bf16.msra.mxu0 0
    %167 = vmatprep.subr.bf16.mxu0 0
    %168 = vmatpush1.bf16.msra.mxu0 0
    %169 = vmatprep.subr.bf16.mxu0 0
    %170 = vmatpush1.bf16.msra.mxu0 0
    %171 = vmatprep.subr.bf16.mxu0 0
    %172 = vmatpush1.bf16.msra.mxu0 0
    %173 = vmatprep.subr.bf16.mxu0 0
    %174 = vmatpush1.bf16.msra.mxu0 0
    %175 = vmatprep.subr.bf16.mxu0 0
    %176 = vmatpush1.bf16.msra.mxu0 %v157
    %177 = vmatprep.subr.bf16.mxu0 0
    %178 = vmatpush1.bf16.msra.mxu0 %v156
    %179 = vmatprep.subr.bf16.mxu0 0
    %180 = vmatpush2.bf16.msra.mxu0 0
    %181 = vmatprep.subr.bf16.mxu0 0
    %182 = vmatpush2.bf16.msra.mxu0 0
    %183 = vmatprep.subr.bf16.mxu0 0
    %184 = vmatpush2.bf16.msra.mxu0 0
    %185 = vmatprep.subr.bf16.mxu0 0
    %186 = vmatpush2.bf16.msra.mxu0 0
    %187 = vmatprep.subr.bf16.mxu0 0
    %188 = vmatpush2.bf16.msra.mxu0 0
    %189 = vmatprep.subr.bf16.mxu0 0
    %190 = vmatpush2.bf16.msra.mxu0 0
    %191 = vmatprep.subr.bf16.mxu0 0
    %192 = vmatpush2.bf16.msra.mxu0 0
    %193 = vmatprep.subr.bf16.mxu0 0
    %194 = vmatpush2.bf16.msra.mxu0 0
    %195 = vmatprep.mubr.bf16.mxu0 0
    %196 = vmatmul.mubr.bf16.gmra.mxu0 %v161
    %v197 = vpop.f32.mrf.mxu0
    %v198 = vadd.f32 %v146, %v197
    %v199 = vpop.f32.mrf.mxu0
    %v200 = vpop.f32.mrf.mxu0
    %v201 = vadd.f32 %v146, %v200
    %v202 = vpop.f32.mrf.mxu0
    %203 = vdwg.mxu0
    %v204 = vlaneseq
    %v205 = vand.u32 %v204, 127
    %vm206 = vcmp.ge.s32.totalorder %v205, 32
    %vm207 = vcmp.lt.s32.totalorder %v205, 48
    %vm208 = vmand %vm206, %vm207
    %vm209 = vcmp.ge.s32.totalorder %v205, 64
    %vm210 = vcmp.lt.s32.totalorder %v205, 80
    %vm211 = vmand %vm209, %vm210
    %vm212 = vcmp.gt.f32.partialorder %v198, 20.0
    %vm213 = vcmp.gt.f32.partialorder %v201, 20.0
    %v214 = vmin.f32 %v198, 20.0
    %v215 = vmin.f32 %v201, 20.0
    %v216 = vmul.f32 %v214, 1.442695
    %v217 = vpow.pop %v216
    %v218 = vmul.f32 %v215, 1.442695
    %v219 = vpow.pop %v218
    %v220 = vadd.f32 %v217, 1.0
    %v221 = vlog2.pop %v220
    %v222 = vmul.f32 %v221, 0.6931472
    %v223 = vmul.f32 -0.5, %v217
    %v224 = vadd.f32 %v223, 1.0
    %v225 = vmul.f32 %v224, %v217
    %v226 = vand.u32 2147483647, %v217
    %vm227 = vcmp.lt.f32.partialorder %v226, 0.0004427343
    %v228 = vsel %vm227, %v225, %v222
    %v229 = vadd.f32 %v219, 1.0
    %v230 = vlog2.pop %v229
    %v231 = vmul.f32 %v230, 0.6931472
    %v232 = vmul.f32 -0.5, %v219
    %v233 = vadd.f32 %v232, 1.0
    %v234 = vmul.f32 %v233, %v219
    %v235 = vand.u32 2147483647, %v219
    %vm236 = vcmp.lt.f32.partialorder %v235, 0.0004427343
    %v237 = vsel %vm236, %v234, %v231
    %v238 = vsel %vm212, %v198, %v228
    %v239 = vsel %vm213, %v201, %v237
    %v240 = vsel %vm208, 1, 0
    %vm241 = vcmp.eq.s32.totalorder %v240, 1
    %v242 = vsel %vm241, %v238, %v198
    %v243 = vsel %vm241, %v239, %v201
    %v244 = vmax.f32 %v242, 0.0
    %v245 = vmax.f32 %v243, 0.0
    %v246 = vsel %vm211, 1, 0
    %vm247 = vcmp.eq.s32.totalorder %v246, 1
    %v248 = vsel %vm247, %v244, %v242
    %v249 = vsel %vm247, %v245, %v243
    %250 = vst [vmem:[#allocation8] sm:$0xff] %v248
    %251 = vst [vmem:[#allocation8 + $0x8] sm:$0xff] %v249
    // Predicated region
    $region34: #{tpu_custom_call.1} parent=1 // pred_check
      _
    $region35: #{tpu_custom_call.1} parent=1 // pred_check_branch
      %253 = sbr.rel (0) target = $region37
    $region36: #{tpu_custom_call.1} parent=1 // pred_region
      %s255 = ssub.s32 256, 256
      %256 = vsyncadd [#allocation4], %s255
      %s257 = sshll.u32 [#allocation8], 4
      %s258 = int_to_ptr.vmem [resolvable:$true] %s257
      %263 = dma.vmem_to_hbm [thread:$0]  %s258, 256, %s5, [#allocation4], 128, 128, 8
    $region37: #{tpu_custom_call.1} parent=1 // pred_fallthru
      _
    // Predicated region
    $region38: #{tpu_custom_call.1} parent=1 // pred_check
      _
    $region39: #{tpu_custom_call.1} parent=1 // pred_check_branch
      %265 = sbr.rel (0) target = $region41
    $region40: #{tpu_custom_call.1} parent=1 // pred_region
      %266 = dma.done [#allocation4], 256
    $region41: #{tpu_custom_call.1} parent=1 // pred_fallthru
      _
    %267 = vsyncpa [#allocation3], 1
    %268 = vsyncpa [#allocation6], 1
    %269 = vsyncpa [#allocation4], 1

</llo_original>
